<compile_context>
chip_gen: v6e
topology: v6e:2x2x1
jax: 0.10.0
libtpu: 0.0.40
codegen_flags: <defaults>
</compile_context>

<pallas_src>
import functools

import jax
import jax.numpy as jnp
from jax.experimental import pallas as pl
from jax.experimental.pallas import tpu as pltpu


_VMEM_LIMIT = 48 * 1024 * 1024  # explicit scoped-VMEM limit; headroom on v7x (64 MiB).


def _pad_rows(a, multiple):
    """Pad the leading (row) axis up to a multiple so the grid divides evenly."""
    n = a.shape[0]
    pad = (-n) % multiple
    if pad:
        a = jnp.pad(a, ((0, pad),) + ((0, 0),) * (a.ndim - 1))
    return a


def _row_tile(n, tile):
    """Tile size for the row axis: full array if small, else a multiple of 8."""
    return n if n <= tile else tile


# ----------------------------------------------------------------------------
# Kernel A: fused relation transform + per-node attention scores
#   H_cat = X @ W_cat        (N, R*Fout)   lane-dense, all relations at once
#   S     = X @ V_cat        (N, 2*R)      S[:, r] = <H[r], att_i[r]>,
#                                          S[:, R+r] = <H[r], att_j[r]>
# Tiled over N; both outputs pipelined; grid axis is megacore-parallel.
# ----------------------------------------------------------------------------
def _rel_transform_kernel(x_ref, w_ref, v_ref, h_ref, s_ref):
    x = x_ref[...]
    h_ref[...] = jnp.dot(x, w_ref[...], preferred_element_type=jnp.float32)
    s_ref[...] = jnp.dot(x, v_ref[...], preferred_element_type=jnp.float32)


def rel_transform_fused(x, w_cat, v_cat, *, tile=1024):
    """x: (N, Fin), w_cat: (Fin, R*Fout), v_cat: (Fin, 2R)
    -> (H_cat (N, R*Fout), S (N, 2R)) f32."""
    N, Fin = x.shape
    RF = w_cat.shape[1]
    S2 = v_cat.shape[1]
    tn = _row_tile(N, tile)
    x_p = _pad_rows(x, tn)
    Np = x_p.shape[0]

    h, s = pl.pallas_call(
        _rel_transform_kernel,
        out_shape=(jax.ShapeDtypeStruct((Np, RF), jnp.float32),
                   jax.ShapeDtypeStruct((Np, S2), jnp.float32)),
        grid=(Np // tn,),
        in_specs=[
            pl.BlockSpec((tn, Fin), lambda i: (i, 0)),
            pl.BlockSpec((Fin, RF), lambda i: (0, 0)),   # weights resident in VMEM
            pl.BlockSpec((Fin, S2), lambda i: (0, 0)),
        ],
        out_specs=(pl.BlockSpec((tn, RF), lambda i: (i, 0)),
                   pl.BlockSpec((tn, S2), lambda i: (i, 0))),
        compiler_params=pltpu.CompilerParams(
            dimension_semantics=("parallel",),
            vmem_limit_bytes=_VMEM_LIMIT),
    )(x_p, w_cat, v_cat)
    return h[:N], s[:N]


# ----------------------------------------------------------------------------
# Kernel C: RGAT update + outer ReLU:  relu(agg + X @ root + bias)
# Tiled over N; root/bias stay resident across the grid.
# ----------------------------------------------------------------------------
def _update_relu_kernel(agg_ref, x_ref, root_ref, bias_ref, out_ref):
    out_ref[...] = jnp.maximum(
        agg_ref[...]
        + jnp.dot(x_ref[...], root_ref[...], preferred_element_type=jnp.float32)
        + bias_ref[...],
        0.0,
    )


def update_relu(agg, x, root, bias, *, tile=1024):
    """agg: (N, Fout), x: (N, Fin), root: (Fin, Fout), bias: (1, Fout)."""
    N, Fout = agg.shape
    Fin = x.shape[1]
    tn = _row_tile(N, tile)
    agg_p = _pad_rows(agg, tn)
    x_p = _pad_rows(x, tn)
    Np = agg_p.shape[0]

    out = pl.pallas_call(
        _update_relu_kernel,
        out_shape=jax.ShapeDtypeStruct((Np, Fout), jnp.float32),
        grid=(Np // tn,),
        in_specs=[
            pl.BlockSpec((tn, Fout), lambda i: (i, 0)),
            pl.BlockSpec((tn, Fin), lambda i: (i, 0)),
            pl.BlockSpec((Fin, Fout), lambda i: (0, 0)),
            pl.BlockSpec((1, Fout), lambda i: (0, 0)),
        ],
        out_specs=pl.BlockSpec((tn, Fout), lambda i: (i, 0)),
        compiler_params=pltpu.CompilerParams(
            dimension_semantics=("parallel",),
            vmem_limit_bytes=_VMEM_LIMIT),
    )(agg_p, x_p, root, bias)
    return out[:N]


# ----------------------------------------------------------------------------
# Kernel D: fused 4-layer MLP head (batch is tiny; single grid point is fine)
# ----------------------------------------------------------------------------
def _mlp_kernel(h_ref, w1, b1, w2, b2, w3, b3, w4, b4, out_ref):
    h = jnp.maximum(
        jnp.dot(h_ref[...], w1[...], preferred_element_type=jnp.float32) + b1[...], 0.0)
    h = jnp.maximum(
        jnp.dot(h, w2[...], preferred_element_type=jnp.float32) + b2[...], 0.0)
    h = jnp.maximum(
        jnp.dot(h, w3[...], preferred_element_type=jnp.float32) + b3[...], 0.0)
    out_ref[...] = jnp.dot(h, w4[...], preferred_element_type=jnp.float32) + b4[...]


def mlp_head(h_cat, w1, b1, w2, b2, w3, b3, w4, b4):
    B = h_cat.shape[0]
    out_dim = w4.shape[1]
    return pl.pallas_call(
        _mlp_kernel,
        out_shape=jax.ShapeDtypeStruct((B, out_dim), jnp.float32),
        compiler_params=pltpu.CompilerParams(vmem_limit_bytes=_VMEM_LIMIT),
    )(h_cat, w1, b1, w2, b2, w3, b3, w4, b4)


# ----------------------------------------------------------------------------
# Full forward pass (gathers / segment ops stay in JAX glue)
# ----------------------------------------------------------------------------
@functools.partial(jax.jit, static_argnames=("n_node", "n_relation"))
def tgcn_forward(params, node_ids, edge_index, edge_type, users, bundles,
                 *, n_node, n_relation):
    R = n_relation
    N = n_node

    # Embedding lookup (glue gather).
    x = params["embedding"][node_ids]                               # (N, Fin)

    # Basis decomposition of relation weights (tiny: (R,B) @ (B, Fin*Fout)).
    nb, Fin, Fout = params["basis"].shape
    w_rel = (params["weight"] @ params["basis"].reshape(nb, Fin * Fout)
             ).reshape(R, Fin, Fout)                                # (R, Fin, Fout)

    # Lane-concatenate the relation weights: (Fin, R*Fout) so one matmul
    # produces all relations with a lane-dense (>=128-wide) output.
    w_cat = jnp.transpose(w_rel, (1, 0, 2)).reshape(Fin, R * Fout)

    # Fold the attention vectors into the transform:
    #   s_i[n, r] = H[r, n] . att_i[r] = x[n] @ (W_r @ att_i[r])
    # so per-edge attention logits become scalar gathers (no (E, Fout) h_i).
    a_i = params["att"][:, :Fout]                                   # (R, Fout)
    a_j = params["att"][:, Fout:]                                   # (R, Fout)
    v_i = jnp.einsum("rio,ro->ir", w_rel, a_i)                      # (Fin, R)
    v_j = jnp.einsum("rio,ro->ir", w_rel, a_j)                      # (Fin, R)
    v_cat = jnp.concatenate([v_i, v_j], axis=1)                     # (Fin, 2R)

    # Pallas kernel A (fused): H_cat = X @ W_cat, S = X @ V_cat.
    h_cat, s = rel_transform_fused(x, w_cat, v_cat)                 # (N,R*Fout),(N,2R)
    H = h_cat.reshape(N, R, Fout)                                   # view

    src = edge_index[0]   # j (source)
    dst = edge_index[1]   # i (target)

    # Per-edge gathers (glue): only h_j (needed for messages) and scalar scores.
    h_j = H[src, edge_type]                                         # (E, Fout)
    alpha = s[dst, edge_type] + s[src, R + edge_type]               # (E,)
    alpha = jnp.where(alpha > 0, alpha, 0.2 * alpha)                # leaky_relu(0.2)

    # Segment softmax grouped by (target node, relation).
    # TODO(synk): segment softmax / scatter-add are data-dependent scatter ops;
    # kept in JAX (jax.ops.segment_*) rather than Pallas. A scalar-prefetch
    # Pallas kernel over dst-sorted edges would fuse this with the h_j gather.
    group = dst * R + edge_type                                     # (E,)
    num_groups = N * R
    g_max = jax.ops.segment_max(alpha, group, num_segments=num_groups)
    alpha = jnp.exp(alpha - g_max[group])
    g_sum = jax.ops.segment_sum(alpha, group, num_segments=num_groups)
    alpha = alpha / (g_sum[group] + 1e-16)

    # Weighted messages + scatter-add aggregation to target nodes.
    msg = h_j * alpha[:, None]                                      # (E, Fout)
    agg = jax.ops.segment_sum(msg, dst, num_segments=N)             # (N, Fout)

    # Pallas kernel C: h = relu(agg + x @ root + bias)
    h = update_relu(agg, x, params["root"], params["bias"])         # (N, Fout)

    # Gather user / bundle node representations and run the MLP head.
    h_u = h[users]                                                  # (B, Fout)
    h_b = h[bundles]                                                # (B, Fout)
    h_ub = jnp.concatenate([h_u, h_b], axis=1)                      # (B, 2*Fout)

    logits = mlp_head(
        h_ub,
        params["w1"], params["b1"],
        params["w2"], params["b2"],
        params["w3"], params["b3"],
        params["w4"], params["b4"],
    )                                                               # (B, 1)
    return logits


# ----------------------------------------------------------------------------
# Deterministic parameter init (xavier-uniform-like, mirrors reset_parameters)
# ----------------------------------------------------------------------------
def glorot(key, shape):
    fan_in, fan_out = shape[-2], shape[-1]
    lim = (6.0 / (fan_in + fan_out)) ** 0.5
    return jax.random.uniform(key, shape, jnp.float32, -lim, lim)


def make_params(key, n_node, embed_dim, conv_dim, n_relation, n_basis,
                hidden_dim, output_dim):
    ks = jax.random.split(key, 12)
    Fin, Fout = embed_dim, conv_dim
    params = {
        "embedding": glorot(ks[0], (n_node, embed_dim)),
        "basis":     glorot(ks[1], (n_basis, Fin, Fout)),
        "weight":    glorot(ks[2], (n_relation, n_basis)),
        "att":       glorot(ks[3], (n_relation, 2 * Fout)),
        "root":      glorot(ks[4], (Fin, Fout)),
        "bias":      jnp.zeros((1, Fout), jnp.float32),
        # Linear layers stored as (in, out) matrices (y = x @ W + b).
        "w1": glorot(ks[5], (2 * Fout, hidden_dim[0])),
        "b1": jnp.zeros((1, hidden_dim[0]), jnp.float32),
        "w2": glorot(ks[6], (hidden_dim[0], hidden_dim[1])),
        "b2": jnp.zeros((1, hidden_dim[1]), jnp.float32),
        "w3": glorot(ks[7], (hidden_dim[1], hidden_dim[2])),
        "b3": jnp.zeros((1, hidden_dim[2]), jnp.float32),
        "w4": glorot(ks[8], (hidden_dim[2], output_dim)),
        "b4": jnp.zeros((1, output_dim), jnp.float32),
    }
    return params


if __name__ == "__main__":
    # Small, forward-consistent config.
    n_node = 64
    n_relation = 4
    n_basis = 8
    embed_dim = 32
    conv_dim = 32
    hidden_dim = (64, 32, 16)
    output_dim = 1          # n_class == 2
    n_edges = 128
    batch = 8

    key = jax.random.PRNGKey(0)
    kp, ke1, ke2, ke3, ku, kb = jax.random.split(key, 6)

    params = make_params(kp, n_node, embed_dim, conv_dim, n_relation, n_basis,
                         hidden_dim, output_dim)

    node_ids = jnp.arange(n_node, dtype=jnp.int32)                  # data.x
    src = jax.random.randint(ke1, (n_edges,), 0, n_node, jnp.int32)
    dst = jax.random.randint(ke2, (n_edges,), 0, n_node, jnp.int32)
    edge_index = jnp.stack([src, dst], axis=0)                      # (2, E)
    edge_type = jax.random.randint(ke3, (n_edges,), 0, n_relation, jnp.int32)
    users = jax.random.randint(ku, (batch,), 0, n_node, jnp.int32)
    bundles = jax.random.randint(kb, (batch,), 0, n_node, jnp.int32)

    logits = tgcn_forward(params, node_ids, edge_index, edge_type,
                          users, bundles,
                          n_node=n_node, n_relation=n_relation)
    jax.block_until_ready(logits)
    assert logits.shape == (batch, output_dim)
    assert bool(jnp.all(jnp.isfinite(logits)))
    print("KERNEL_OK")
</pallas_src>

<mosaic_0001>
module attributes {stable_mosaic.version = 11 : i64} {
  func.func private @main(%arg0: i32) attributes {dimension_semantics = [#tpu.dimension_semantics<core_parallel>], iteration_bounds = array<i64: 2>, tpu.core_type = #tpu.core_type<sc_scalar_subcore>, window_params = []} {
    return
  }
}

module attributes {stable_mosaic.version = 11 : i64} {
  func.func private @main(%arg0: i32) attributes {dimension_semantics = [#tpu.dimension_semantics<core_parallel>], iteration_bounds = array<i64: 2>, tpu.core_type = #tpu.core_type<sc_scalar_subcore>, window_params = []} {
    return
  }
}

module attributes {stable_mosaic.version = 11 : i64} {
  func.func @_rel_transform_kernel(%arg0: i32, %arg1: memref<64x32xf32, #tpu.memory_space<vmem>>, %arg2: memref<32x128xf32, #tpu.memory_space<vmem>>, %arg3: memref<32x8xf32, #tpu.memory_space<vmem>>, %arg4: memref<64x128xf32, #tpu.memory_space<vmem>>, %arg5: memref<64x8xf32, #tpu.memory_space<vmem>>) attributes {dimension_semantics = [#tpu.dimension_semantics<parallel>], iteration_bounds = array<i64: 1>, scalar_prefetch = 0 : i64, scratch_operands = 0 : i64, tpu.core_type = #tpu.core_type<tc>, window_params = [{transform_indices = @transform_0, window_bounds = array<i64: 64, 32>}, {pipeline_mode = #tpu.pipeline_mode<synchronous>, transform_indices = @transform_1, window_bounds = array<i64: 32, 128>}, {pipeline_mode = #tpu.pipeline_mode<synchronous>, transform_indices = @transform_2, window_bounds = array<i64: 32, 8>}, {transform_indices = @transform_3, window_bounds = array<i64: 64, 128>}, {transform_indices = @transform_4, window_bounds = array<i64: 64, 8>}]} {
    %c0 = arith.constant 0 : index
    %c0_0 = arith.constant 0 : index
    %0 = vector.load %arg1[%c0, %c0_0] : memref<64x32xf32, #tpu.memory_space<vmem>>, vector<64x32xf32>
    %c0_1 = arith.constant 0 : index
    %c0_2 = arith.constant 0 : index
    %1 = vector.load %arg2[%c0_1, %c0_2] : memref<32x128xf32, #tpu.memory_space<vmem>>, vector<32x128xf32>
    %cst = arith.constant dense<0.000000e+00> : vector<64x128xf32>
    %2 = tpu.matmul %0, %1, %cst {dimension_numbers = #tpu.dot_dimension_numbers<[1], [0], [0], [1], [0, 0, 1, 1], [], []>} : vector<64x32xf32>, vector<32x128xf32>, vector<64x128xf32> -> vector<64x128xf32>
    %c0_3 = arith.constant 0 : index
    %c0_4 = arith.constant 0 : index
    %3 = vector.load %arg4[%c0_3, %c0_4] : memref<64x128xf32, #tpu.memory_space<vmem>>, vector<64x128xf32>
    tpu.vector_store %arg4[%c0_3, %c0_4], %2 {strides = array<i32>} : memref<64x128xf32, #tpu.memory_space<vmem>>, vector<64x128xf32>,
    %c0_5 = arith.constant 0 : index
    %c0_6 = arith.constant 0 : index
    %4 = vector.load %arg3[%c0_5, %c0_6] : memref<32x8xf32, #tpu.memory_space<vmem>>, vector<32x8xf32>
    %cst_7 = arith.constant dense<0.000000e+00> : vector<64x8xf32>
    %5 = tpu.matmul %0, %4, %cst_7 {dimension_numbers = #tpu.dot_dimension_numbers<[1], [0], [0], [1], [0, 0, 1, 1], [], []>} : vector<64x32xf32>, vector<32x8xf32>, vector<64x8xf32> -> vector<64x8xf32>
    %c0_8 = arith.constant 0 : index
    %c0_9 = arith.constant 0 : index
    %6 = vector.load %arg5[%c0_8, %c0_9] : memref<64x8xf32, #tpu.memory_space<vmem>>, vector<64x8xf32>
    tpu.vector_store %arg5[%c0_8, %c0_9], %5 {strides = array<i32>} : memref<64x8xf32, #tpu.memory_space<vmem>>, vector<64x8xf32>,
    return
  }
  func.func @transform_0(%arg0: i32) -> (i32, i32) {
    %c0_i32 = arith.constant 0 : i32
    %c0_i32_0 = arith.constant 0 : i32
    return %arg0, %c0_i32 : i32, i32
  }
  func.func @transform_1(%arg0: i32) -> (i32, i32) {
    %c0_i32 = arith.constant 0 : i32
    %c0_i32_0 = arith.constant 0 : i32
    %c0_i32_1 = arith.constant 0 : i32
    return %c0_i32, %c0_i32_0 : i32, i32
  }
  func.func @transform_2(%arg0: i32) -> (i32, i32) {
    %c0_i32 = arith.constant 0 : i32
    %c0_i32_0 = arith.constant 0 : i32
    %c0_i32_1 = arith.constant 0 : i32
    return %c0_i32, %c0_i32_0 : i32, i32
  }
  func.func @transform_3(%arg0: i32) -> (i32, i32) {
    %c0_i32 = arith.constant 0 : i32
    %c0_i32_0 = arith.constant 0 : i32
    return %arg0, %c0_i32 : i32, i32
  }
  func.func @transform_4(%arg0: i32) -> (i32, i32) {
    %c0_i32 = arith.constant 0 : i32
    %c0_i32_0 = arith.constant 0 : i32
    return %arg0, %c0_i32 : i32, i32
  }
}

module attributes {stable_mosaic.version = 11 : i64} {
  func.func @_update_relu_kernel(%arg0: i32, %arg1: memref<64x32xf32, #tpu.memory_space<vmem>>, %arg2: memref<64x32xf32, #tpu.memory_space<vmem>>, %arg3: memref<32x32xf32, #tpu.memory_space<vmem>>, %arg4: memref<1x32xf32, #tpu.memory_space<vmem>>, %arg5: memref<64x32xf32, #tpu.memory_space<vmem>>) attributes {dimension_semantics = [#tpu.dimension_semantics<parallel>], iteration_bounds = array<i64: 1>, scalar_prefetch = 0 : i64, scratch_operands = 0 : i64, tpu.core_type = #tpu.core_type<tc>, window_params = [{transform_indices = @transform_0, window_bounds = array<i64: 64, 32>}, {transform_indices = @transform_1, window_bounds = array<i64: 64, 32>}, {pipeline_mode = #tpu.pipeline_mode<synchronous>, transform_indices = @transform_2, window_bounds = array<i64: 32, 32>}, {pipeline_mode = #tpu.pipeline_mode<synchronous>, transform_indices = @transform_3, window_bounds = array<i64: 1, 32>}, {transform_indices = @transform_4, window_bounds = array<i64: 64, 32>}]} {
    %c0 = arith.constant 0 : index
    %c0_0 = arith.constant 0 : index
    %0 = vector.load %arg1[%c0, %c0_0] : memref<64x32xf32, #tpu.memory_space<vmem>>, vector<64x32xf32>
    %c0_1 = arith.constant 0 : index
    %c0_2 = arith.constant 0 : index
    %1 = vector.load %arg2[%c0_1, %c0_2] : memref<64x32xf32, #tpu.memory_space<vmem>>, vector<64x32xf32>
    %c0_3 = arith.constant 0 : index
    %c0_4 = arith.constant 0 : index
    %2 = vector.load %arg3[%c0_3, %c0_4] : memref<32x32xf32, #tpu.memory_space<vmem>>, vector<32x32xf32>
    %cst = arith.constant dense<0.000000e+00> : vector<64x32xf32>
    %3 = tpu.matmul %1, %2, %cst {dimension_numbers = #tpu.dot_dimension_numbers<[1], [0], [0], [1], [0, 0, 1, 1], [], []>} : vector<64x32xf32>, vector<32x32xf32>, vector<64x32xf32> -> vector<64x32xf32>
    %4 = arith.addf %0, %3 : vector<64x32xf32>
    %c0_5 = arith.constant 0 : index
    %c0_6 = arith.constant 0 : index
    %5 = vector.load %arg4[%c0_5, %c0_6] : memref<1x32xf32, #tpu.memory_space<vmem>>, vector<1x32xf32>
    %6 = vector.broadcast %5 : vector<1x32xf32> to vector<64x32xf32>
    %7 = arith.addf %4, %6 : vector<64x32xf32>
    %cst_7 = arith.constant 0.000000e+00 : f32
    %8 = vector.broadcast %cst_7 : f32 to vector<64x32xf32>
    %9 = arith.maximumf %7, %8 : vector<64x32xf32>
    %c0_8 = arith.constant 0 : index
    %c0_9 = arith.constant 0 : index
    %10 = vector.load %arg5[%c0_8, %c0_9] : memref<64x32xf32, #tpu.memory_space<vmem>>, vector<64x32xf32>
    tpu.vector_store %arg5[%c0_8, %c0_9], %9 {strides = array<i32>} : memref<64x32xf32, #tpu.memory_space<vmem>>, vector<64x32xf32>,
    return
  }
  func.func @transform_0(%arg0: i32) -> (i32, i32) {
    %c0_i32 = arith.constant 0 : i32
    %c0_i32_0 = arith.constant 0 : i32
    return %arg0, %c0_i32 : i32, i32
  }
  func.func @transform_1(%arg0: i32) -> (i32, i32) {
    %c0_i32 = arith.constant 0 : i32
    %c0_i32_0 = arith.constant 0 : i32
    return %arg0, %c0_i32 : i32, i32
  }
  func.func @transform_2(%arg0: i32) -> (i32, i32) {
    %c0_i32 = arith.constant 0 : i32
    %c0_i32_0 = arith.constant 0 : i32
    %c0_i32_1 = arith.constant 0 : i32
    return %c0_i32, %c0_i32_0 : i32, i32
  }
  func.func @transform_3(%arg0: i32) -> (i32, i32) {
    %c0_i32 = arith.constant 0 : i32
    %c0_i32_0 = arith.constant 0 : i32
    %c0_i32_1 = arith.constant 0 : i32
    return %c0_i32, %c0_i32_0 : i32, i32
  }
  func.func @transform_4(%arg0: i32) -> (i32, i32) {
    %c0_i32 = arith.constant 0 : i32
    %c0_i32_0 = arith.constant 0 : i32
    return %arg0, %c0_i32 : i32, i32
  }
}

module attributes {stable_mosaic.version = 11 : i64} {
  func.func @_mlp_kernel(%arg0: memref<8x64xf32, #tpu.memory_space<vmem>>, %arg1: memref<64x64xf32, #tpu.memory_space<vmem>>, %arg2: memref<1x64xf32, #tpu.memory_space<vmem>>, %arg3: memref<64x32xf32, #tpu.memory_space<vmem>>, %arg4: memref<1x32xf32, #tpu.memory_space<vmem>>, %arg5: memref<32x16xf32, #tpu.memory_space<vmem>>, %arg6: memref<1x16xf32, #tpu.memory_space<vmem>>, %arg7: memref<16x1xf32, #tpu.memory_space<vmem>>, %arg8: memref<1x1xf32, #tpu.memory_space<vmem>>, %arg9: memref<8x1xf32, #tpu.memory_space<vmem>>) attributes {dimension_semantics = [], scalar_prefetch = 0 : i64, scratch_operands = 0 : i64, tpu.core_type = #tpu.core_type<tc>} {
    %c0 = arith.constant 0 : index
    %c0_0 = arith.constant 0 : index
    %0 = vector.load %arg0[%c0, %c0_0] : memref<8x64xf32, #tpu.memory_space<vmem>>, vector<8x64xf32>
    %c0_1 = arith.constant 0 : index
    %c0_2 = arith.constant 0 : index
    %1 = vector.load %arg1[%c0_1, %c0_2] : memref<64x64xf32, #tpu.memory_space<vmem>>, vector<64x64xf32>
    %cst = arith.constant dense<0.000000e+00> : vector<8x64xf32>
    %2 = tpu.matmul %0, %1, %cst {dimension_numbers = #tpu.dot_dimension_numbers<[1], [0], [0], [1], [0, 0, 1, 1], [], []>} : vector<8x64xf32>, vector<64x64xf32>, vector<8x64xf32> -> vector<8x64xf32>
    %c0_3 = arith.constant 0 : index
    %c0_4 = arith.constant 0 : index
    %3 = vector.load %arg2[%c0_3, %c0_4] : memref<1x64xf32, #tpu.memory_space<vmem>>, vector<1x64xf32>
    %4 = vector.broadcast %3 : vector<1x64xf32> to vector<8x64xf32>
    %5 = arith.addf %2, %4 : vector<8x64xf32>
    %cst_5 = arith.constant 0.000000e+00 : f32
    %6 = vector.broadcast %cst_5 : f32 to vector<8x64xf32>
    %7 = arith.maximumf %5, %6 : vector<8x64xf32>
    %c0_6 = arith.constant 0 : index
    %c0_7 = arith.constant 0 : index
    %8 = vector.load %arg3[%c0_6, %c0_7] : memref<64x32xf32, #tpu.memory_space<vmem>>, vector<64x32xf32>
    %cst_8 = arith.constant dense<0.000000e+00> : vector<8x32xf32>
    %9 = tpu.matmul %7, %8, %cst_8 {dimension_numbers = #tpu.dot_dimension_numbers<[1], [0], [0], [1], [0, 0, 1, 1], [], []>} : vector<8x64xf32>, vector<64x32xf32>, vector<8x32xf32> -> vector<8x32xf32>
    %c0_9 = arith.constant 0 : index
    %c0_10 = arith.constant 0 : index
    %10 = vector.load %arg4[%c0_9, %c0_10] : memref<1x32xf32, #tpu.memory_space<vmem>>, vector<1x32xf32>
    %11 = vector.broadcast %10 : vector<1x32xf32> to vector<8x32xf32>
    %12 = arith.addf %9, %11 : vector<8x32xf32>
    %cst_11 = arith.constant 0.000000e+00 : f32
    %13 = vector.broadcast %cst_11 : f32 to vector<8x32xf32>
    %14 = arith.maximumf %12, %13 : vector<8x32xf32>
    %c0_12 = arith.constant 0 : index
    %c0_13 = arith.constant 0 : index
    %15 = vector.load %arg5[%c0_12, %c0_13] : memref<32x16xf32, #tpu.memory_space<vmem>>, vector<32x16xf32>
    %cst_14 = arith.constant dense<0.000000e+00> : vector<8x16xf32>
    %16 = tpu.matmul %14, %15, %cst_14 {dimension_numbers = #tpu.dot_dimension_numbers<[1], [0], [0], [1], [0, 0, 1, 1], [], []>} : vector<8x32xf32>, vector<32x16xf32>, vector<8x16xf32> -> vector<8x16xf32>
    %c0_15 = arith.constant 0 : index
    %c0_16 = arith.constant 0 : index
    %17 = vector.load %arg6[%c0_15, %c0_16] : memref<1x16xf32, #tpu.memory_space<vmem>>, vector<1x16xf32>
    %18 = vector.broadcast %17 : vector<1x16xf32> to vector<8x16xf32>
    %19 = arith.addf %16, %18 : vector<8x16xf32>
    %cst_17 = arith.constant 0.000000e+00 : f32
    %20 = vector.broadcast %cst_17 : f32 to vector<8x16xf32>
    %21 = arith.maximumf %19, %20 : vector<8x16xf32>
    %c0_18 = arith.constant 0 : index
    %c0_19 = arith.constant 0 : index
    %22 = vector.load %arg7[%c0_18, %c0_19] : memref<16x1xf32, #tpu.memory_space<vmem>>, vector<16x1xf32>
    %cst_20 = arith.constant dense<0.000000e+00> : vector<8x1xf32>
    %23 = tpu.matmul %21, %22, %cst_20 {dimension_numbers = #tpu.dot_dimension_numbers<[1], [0], [0], [1], [0, 0, 1, 1], [], []>} : vector<8x16xf32>, vector<16x1xf32>, vector<8x1xf32> -> vector<8x1xf32>
    %c0_21 = arith.constant 0 : index
    %c0_22 = arith.constant 0 : index
    %24 = vector.load %arg8[%c0_21, %c0_22] : memref<1x1xf32, #tpu.memory_space<vmem>>, vector<1x1xf32>
    %25 = vector.broadcast %24 : vector<1x1xf32> to vector<8x1xf32>
    %26 = arith.addf %23, %25 : vector<8x1xf32>
    %c0_23 = arith.constant 0 : index
    %c0_24 = arith.constant 0 : index
    %27 = vector.load %arg9[%c0_23, %c0_24] : memref<8x1xf32, #tpu.memory_space<vmem>>, vector<8x1xf32>
    tpu.vector_store %arg9[%c0_23, %c0_24], %26 {strides = array<i32>} : memref<8x1xf32, #tpu.memory_space<vmem>>, vector<8x1xf32>,
    return
  }
}

</mosaic_0001>

<llo_original>
// kernel: tgcn_forward.3
$region0: #{tgcn_forward.3}
  #allocation0 [shape = 'u32[]', space=smem, size = 0x4, offset = 0x4, fixed_abs, tag = 'smem constant byte address 0x4 - core index']
  #allocation1 [shape = 'u32[144,128]{1,0:T(1,128)}', space=vmem, size = 0x12000, scoped, tag = 'internal scratch']
  %s0 = inlined_call_operand.vmem [shape: f32[64,32], index: 0, kind: input, shape index: {}]
  %s1 = inlined_call_operand.vmem [shape: f32[32,128], index: 1, kind: input, shape index: {}]
  %s2 = inlined_call_operand.vmem [shape: f32[32,8], index: 2, kind: input, shape index: {}]
  %s3 = inlined_call_operand.vmem [shape: f32[64,128], index: 3, kind: output, shape index: {0}]
  %s4 = inlined_call_operand.vmem [shape: f32[64,8], index: 4, kind: output, shape index: {1}]
  %5 = xla_tuple %s3, %s4
  %s6 = sld [smem:[#allocation0]]
  $region30: #{tgcn_forward.3} parent=0
    _
  %s8 = ssub.s32 1, %s6
  %s9 = scalar_select 0, %s8, %s6
  // Predicated region
  $region2: #{tgcn_forward.3} parent=0 // pred_check
    _
  $region3: #{tgcn_forward.3} parent=0 // pred_check_branch
    %11 = sbr.rel (0) target = $region5
  $region4: #{tgcn_forward.3} parent=0 // pred_region
    _
  $region5: #{tgcn_forward.3} parent=0 // pred_fallthru
    _
  // Predicated region
  $region6: #{tgcn_forward.3} parent=0 // pred_check
    _
  $region7: #{tgcn_forward.3} parent=0 // pred_check_branch
    %13 = sbr.rel (0) target = $region9
  $region8: #{tgcn_forward.3} parent=0 // pred_region
    _
  $region9: #{tgcn_forward.3} parent=0 // pred_fallthru
    _
  // Predicated region
  $region10: #{tgcn_forward.3} parent=0 // pred_check
    _
  $region11: #{tgcn_forward.3} parent=0 // pred_check_branch
    %15 = sbr.rel (0) target = $region13
  $region12: #{tgcn_forward.3} parent=0 // pred_region
    _
  $region13: #{tgcn_forward.3} parent=0 // pred_fallthru
    _
  %v16 = vld [vmem:[%s0] sm:$0xff]
  %v17 = vld [vmem:[%s0 + $0x8] sm:$0xff]
  %v18 = vld [vmem:[%s0 + $0x10] sm:$0xff]
  %v19 = vld [vmem:[%s0 + $0x18] sm:$0xff]
  %v20 = vld [vmem:[%s0 + $0x20] sm:$0xff]
  %v21 = vld [vmem:[%s0 + $0x28] sm:$0xff]
  %v22 = vld [vmem:[%s0 + $0x30] sm:$0xff]
  %v23 = vld [vmem:[%s0 + $0x38] sm:$0xff]
  %v24 = vld [vmem:[%s1] sm:$0xff]
  %v25 = vld [vmem:[%s1 + $0x8] sm:$0xff]
  %v26 = vld [vmem:[%s1 + $0x10] sm:$0xff]
  %v27 = vld [vmem:[%s1 + $0x18] sm:$0xff]
  %vm28 = vcmask 261120
  %v30 = vsel %vm28, %v16, 0
  %v33 = vsel %vm28, %v17, 0
  %v36 = vsel %vm28, %v18, 0
  %v39 = vsel %vm28, %v19, 0
  %v42 = vsel %vm28, %v20, 0
  %v45 = vsel %vm28, %v21, 0
  %v48 = vsel %vm28, %v22, 0
  %v51 = vsel %vm28, %v23, 0
  %53 = vmatprep.subr.mxu0 0.0
  %54 = vmatpush1.msra.mxu0 0.0
  %55 = vmatprep.subr.mxu0 0.0
  %56 = vmatpush1.msra.mxu0 0.0
  %57 = vmatprep.subr.mxu0 0.0
  %58 = vmatpush1.msra.mxu0 0.0
  %59 = vmatprep.subr.mxu0 0.0
  %60 = vmatpush1.msra.mxu0 0.0
  %61 = vmatprep.subr.mxu0 0.0
  %62 = vmatpush1.msra.mxu0 0.0
  %63 = vmatprep.subr.mxu0 0.0
  %64 = vmatpush1.msra.mxu0 0.0
  %65 = vmatprep.subr.mxu0 0.0
  %66 = vmatpush1.msra.mxu0 0.0
  %67 = vmatprep.subr.mxu0 0.0
  %68 = vmatpush1.msra.mxu0 0.0
  %69 = vmatprep.subr.mxu0 0.0
  %70 = vmatpush1.msra.mxu0 0.0
  %71 = vmatprep.subr.mxu0 0.0
  %72 = vmatpush1.msra.mxu0 0.0
  %73 = vmatprep.subr.mxu0 0.0
  %74 = vmatpush1.msra.mxu0 0.0
  %75 = vmatprep.subr.mxu0 0.0
  %76 = vmatpush1.msra.mxu0 0.0
  %77 = vmatprep.subr.mxu0 0.0
  %78 = vmatpush1.msra.mxu0 %v27
  %79 = vmatprep.subr.mxu0 0.0
  %80 = vmatpush1.msra.mxu0 %v26
  %81 = vmatprep.subr.mxu0 0.0
  %82 = vmatpush1.msra.mxu0 %v25
  %83 = vmatprep.subr.mxu0 0.0
  %84 = vmatpush1.msra.mxu0 %v24
  %85 = vmatprep.subr.mxu0 0.0
  %86 = vmatpush2.msra.mxu0 0.0
  %87 = vmatprep.subr.mxu0 0.0
  %88 = vmatpush2.msra.mxu0 0.0
  %89 = vmatprep.subr.mxu0 0.0
  %90 = vmatpush2.msra.mxu0 0.0
  %91 = vmatprep.subr.mxu0 0.0
  %92 = vmatpush2.msra.mxu0 0.0
  %93 = vmatprep.subr.mxu0 0.0
  %94 = vmatpush2.msra.mxu0 0.0
  %95 = vmatprep.subr.mxu0 0.0
  %96 = vmatpush2.msra.mxu0 0.0
  %97 = vmatprep.subr.mxu0 0.0
  %98 = vmatpush2.msra.mxu0 0.0
  %99 = vmatprep.subr.mxu0 0.0
  %100 = vmatpush2.msra.mxu0 0.0
  %101 = vmatprep.subr.mxu0 0.0
  %102 = vmatpush2.msra.mxu0 0.0
  %103 = vmatprep.subr.mxu0 0.0
  %104 = vmatpush2.msra.mxu0 0.0
  %105 = vmatprep.subr.mxu0 0.0
  %106 = vmatpush2.msra.mxu0 0.0
  %107 = vmatprep.subr.mxu0 0.0
  %108 = vmatpush2.msra.mxu0 0.0
  %109 = vmatprep.subr.mxu0 0.0
  %110 = vmatpush2.msra.mxu0 0.0
  %111 = vmatprep.subr.mxu0 0.0
  %112 = vmatpush2.msra.mxu0 0.0
  %113 = vmatprep.subr.mxu0 0.0
  %114 = vmatpush2.msra.mxu0 0.0
  %115 = vmatprep.subr.mxu0 0.0
  %116 = vmatpush2.msra.mxu0 0.0
  %117 = vmatprep.mubr.f32.mxu0 0.0
  %118 = vmatmul.mubr.f32.gmra.mxu0 %v30
  %v119 = vpop.f32.mrf.mxu0
  %v120 = vadd.f32 0.0, %v119
  %v121 = vpop.f32.mrf.mxu0
  %122 = vmatprep.mubr.f32.mxu0 0.0
  %123 = vmatmul.mubr.f32.gmra.mxu0 %v33
  %v124 = vpop.f32.mrf.mxu0
  %v125 = vadd.f32 0.0, %v124
  %v126 = vpop.f32.mrf.mxu0
  %127 = vmatprep.mubr.f32.mxu0 0.0
  %128 = vmatmul.mubr.f32.gmra.mxu0 %v36
  %v129 = vpop.f32.mrf.mxu0
  %v130 = vadd.f32 0.0, %v129
  %v131 = vpop.f32.mrf.mxu0
  %132 = vmatprep.mubr.f32.mxu0 0.0
  %133 = vmatmul.mubr.f32.gmra.mxu0 %v39
  %v134 = vpop.f32.mrf.mxu0
  %v135 = vadd.f32 0.0, %v134
  %v136 = vpop.f32.mrf.mxu0
  %137 = vmatprep.mubr.f32.mxu0 0.0
  %138 = vmatmul.mubr.f32.gmra.mxu0 %v42
  %v139 = vpop.f32.mrf.mxu0
  %v140 = vadd.f32 0.0, %v139
  %v141 = vpop.f32.mrf.mxu0
  %142 = vmatprep.mubr.f32.mxu0 0.0
  %143 = vmatmul.mubr.f32.gmra.mxu0 %v45
  %v144 = vpop.f32.mrf.mxu0
  %v145 = vadd.f32 0.0, %v144
  %v146 = vpop.f32.mrf.mxu0
  %147 = vmatprep.mubr.f32.mxu0 0.0
  %148 = vmatmul.mubr.f32.gmra.mxu0 %v48
  %v149 = vpop.f32.mrf.mxu0
  %v150 = vadd.f32 0.0, %v149
  %v151 = vpop.f32.mrf.mxu0
  %152 = vmatprep.mubr.f32.mxu0 0.0
  %153 = vmatmul.mubr.f32.gmra.mxu0 %v51
  %v154 = vpop.f32.mrf.mxu0
  %v155 = vadd.f32 0.0, %v154
  %v156 = vpop.f32.mrf.mxu0
  %157 = vdwg.mxu0
  %158 = vst [vmem:[%s3] sm:$0xff] %v120
  %159 = vst [vmem:[%s3 + $0x8] sm:$0xff] %v125
  %160 = vst [vmem:[%s3 + $0x10] sm:$0xff] %v130
  %161 = vst [vmem:[%s3 + $0x18] sm:$0xff] %v135
  %162 = vst [vmem:[%s3 + $0x20] sm:$0xff] %v140
  %163 = vst [vmem:[%s3 + $0x28] sm:$0xff] %v145
  %164 = vst [vmem:[%s3 + $0x30] sm:$0xff] %v150
  %165 = vst [vmem:[%s3 + $0x38] sm:$0xff] %v155
  %v166 = vld [vmem:[%s2] sm:$0xff]
  %v167 = vld [vmem:[%s2 + $0x8] sm:$0xff]
  %v168 = vld [vmem:[%s2 + $0x10] sm:$0xff]
  %v169 = vld [vmem:[%s2 + $0x18] sm:$0xff]
  %170 = vmatprep.subr.mxu0 0.0
  %171 = vmatpush1.msra.mxu0 0.0
  %172 = vmatprep.subr.mxu0 0.0
  %173 = vmatpush1.msra.mxu0 0.0
  %174 = vmatprep.subr.mxu0 0.0
  %175 = vmatpush1.msra.mxu0 0.0
  %176 = vmatprep.subr.mxu0 0.0
  %177 = vmatpush1.msra.mxu0 0.0
  %178 = vmatprep.subr.mxu0 0.0
  %179 = vmatpush1.msra.mxu0 0.0
  %180 = vmatprep.subr.mxu0 0.0
  %181 = vmatpush1.msra.mxu0 0.0
  %182 = vmatprep.subr.mxu0 0.0
  %183 = vmatpush1.msra.mxu0 0.0
  %184 = vmatprep.subr.mxu0 0.0
  %185 = vmatpush1.msra.mxu0 0.0
  %186 = vmatprep.subr.mxu0 0.0
  %187 = vmatpush1.msra.mxu0 0.0
  %188 = vmatprep.subr.mxu0 0.0
  %189 = vmatpush1.msra.mxu0 0.0
  %190 = vmatprep.subr.mxu0 0.0
  %191 = vmatpush1.msra.mxu0 0.0
  %192 = vmatprep.subr.mxu0 0.0
  %193 = vmatpush1.msra.mxu0 0.0
  %194 = vmatprep.subr.mxu0 0.0
  %195 = vmatpush1.msra.mxu0 %v169
  %196 = vmatprep.subr.mxu0 0.0
  %197 = vmatpush1.msra.mxu0 %v168
  %198 = vmatprep.subr.mxu0 0.0
  %199 = vmatpush1.msra.mxu0 %v167
  %200 = vmatprep.subr.mxu0 0.0
  %201 = vmatpush1.msra.mxu0 %v166
  %202 = vmatprep.subr.mxu0 0.0
  %203 = vmatpush2.msra.mxu0 0.0
  %204 = vmatprep.subr.mxu0 0.0
  %205 = vmatpush2.msra.mxu0 0.0
  %206 = vmatprep.subr.mxu0 0.0
  %207 = vmatpush2.msra.mxu0 0.0
  %208 = vmatprep.subr.mxu0 0.0
  %209 = vmatpush2.msra.mxu0 0.0
  %210 = vmatprep.subr.mxu0 0.0
  %211 = vmatpush2.msra.mxu0 0.0
  %212 = vmatprep.subr.mxu0 0.0
  %213 = vmatpush2.msra.mxu0 0.0
  %214 = vmatprep.subr.mxu0 0.0
  %215 = vmatpush2.msra.mxu0 0.0
  %216 = vmatprep.subr.mxu0 0.0
  %217 = vmatpush2.msra.mxu0 0.0
  %218 = vmatprep.subr.mxu0 0.0
  %219 = vmatpush2.msra.mxu0 0.0
  %220 = vmatprep.subr.mxu0 0.0
  %221 = vmatpush2.msra.mxu0 0.0
  %222 = vmatprep.subr.mxu0 0.0
  %223 = vmatpush2.msra.mxu0 0.0
  %224 = vmatprep.subr.mxu0 0.0
  %225 = vmatpush2.msra.mxu0 0.0
  %226 = vmatprep.subr.mxu0 0.0
  %227 = vmatpush2.msra.mxu0 0.0
  %228 = vmatprep.subr.mxu0 0.0
  %229 = vmatpush2.msra.mxu0 0.0
  %230 = vmatprep.subr.mxu0 0.0
  %231 = vmatpush2.msra.mxu0 0.0
  %232 = vmatprep.subr.mxu0 0.0
  %233 = vmatpush2.msra.mxu0 0.0
  %234 = vmatprep.mubr.f32.mxu0 0.0
  %235 = vmatmul.mubr.f32.gmra.mxu0 %v30
  %v236 = vpop.f32.mrf.mxu0
  %v237 = vadd.f32 0.0, %v236
  %v238 = vpop.f32.mrf.mxu0
  %239 = vmatprep.mubr.f32.mxu0 0.0
  %240 = vmatmul.mubr.f32.gmra.mxu0 %v33
  %v241 = vpop.f32.mrf.mxu0
  %v242 = vadd.f32 0.0, %v241
  %v243 = vpop.f32.mrf.mxu0
  %244 = vmatprep.mubr.f32.mxu0 0.0
  %245 = vmatmul.mubr.f32.gmra.mxu0 %v36
  %v246 = vpop.f32.mrf.mxu0
  %v247 = vadd.f32 0.0, %v246
  %v248 = vpop.f32.mrf.mxu0
  %249 = vmatprep.mubr.f32.mxu0 0.0
  %250 = vmatmul.mubr.f32.gmra.mxu0 %v39
  %v251 = vpop.f32.mrf.mxu0
  %v252 = vadd.f32 0.0, %v251
  %v253 = vpop.f32.mrf.mxu0
  %254 = vmatprep.mubr.f32.mxu0 0.0
  %255 = vmatmul.mubr.f32.gmra.mxu0 %v42
  %v256 = vpop.f32.mrf.mxu0
  %v257 = vadd.f32 0.0, %v256
  %v258 = vpop.f32.mrf.mxu0
  %259 = vmatprep.mubr.f32.mxu0 0.0
  %260 = vmatmul.mubr.f32.gmra.mxu0 %v45
  %v261 = vpop.f32.mrf.mxu0
  %v262 = vadd.f32 0.0, %v261
  %v263 = vpop.f32.mrf.mxu0
  %264 = vmatprep.mubr.f32.mxu0 0.0
  %265 = vmatmul.mubr.f32.gmra.mxu0 %v48
  %v266 = vpop.f32.mrf.mxu0
  %v267 = vadd.f32 0.0, %v266
  %v268 = vpop.f32.mrf.mxu0
  %269 = vmatprep.mubr.f32.mxu0 0.0
  %270 = vmatmul.mubr.f32.gmra.mxu0 %v51
  %v271 = vpop.f32.mrf.mxu0
  %v272 = vadd.f32 0.0, %v271
  %v273 = vpop.f32.mrf.mxu0
  %274 = vdwg.mxu0
  %vm275 = vcmask 64512
  %276 = vst.msk [vmem:[%s4] sm:$0xff] %vm275, %v237
  %277 = vst.msk [vmem:[%s4 + $0x8] sm:$0xff] %vm275, %v242
  %278 = vst.msk [vmem:[%s4 + $0x10] sm:$0xff] %vm275, %v247
  %279 = vst.msk [vmem:[%s4 + $0x18] sm:$0xff] %vm275, %v252
  %280 = vst.msk [vmem:[%s4 + $0x20] sm:$0xff] %vm275, %v257
  %281 = vst.msk [vmem:[%s4 + $0x28] sm:$0xff] %vm275, %v262
  %282 = vst.msk [vmem:[%s4 + $0x30] sm:$0xff] %vm275, %v267
  %283 = vst.msk [vmem:[%s4 + $0x38] sm:$0xff] %vm275, %v272
  // Predicated region
  $region14: #{tgcn_forward.3} parent=0 // pred_check
    _
  $region15: #{tgcn_forward.3} parent=0 // pred_check_branch
    %285 = sbr.rel (0) target = $region17
  $region16: #{tgcn_forward.3} parent=0 // pred_region
    _
  $region17: #{tgcn_forward.3} parent=0 // pred_fallthru
    _
  // Predicated region
  $region18: #{tgcn_forward.3} parent=0 // pred_check
    _
  $region19: #{tgcn_forward.3} parent=0 // pred_check_branch
    %287 = sbr.rel (0) target = $region21
  $region20: #{tgcn_forward.3} parent=0 // pred_region
    _
  $region21: #{tgcn_forward.3} parent=0 // pred_fallthru
    _
  // Predicated region
  $region22: #{tgcn_forward.3} parent=0 // pred_check
    _
  $region23: #{tgcn_forward.3} parent=0 // pred_check_branch
    %289 = sbr.rel (0) target = $region25
  $region24: #{tgcn_forward.3} parent=0 // pred_region
    _
  $region25: #{tgcn_forward.3} parent=0 // pred_fallthru
    _
  // Predicated region
  $region26: #{tgcn_forward.3} parent=0 // pred_check
    _
  $region27: #{tgcn_forward.3} parent=0 // pred_check_branch
    %291 = sbr.rel (0) target = $region29
  $region28: #{tgcn_forward.3} parent=0 // pred_region
    _
  $region29: #{tgcn_forward.3} parent=0 // pred_fallthru
    _

// kernel: tgcn_forward.4
$region0: #{tgcn_forward.4}
  #allocation0 [shape = 'u32[]', space=smem, size = 0x4, offset = 0x4, fixed_abs, tag = 'smem constant byte address 0x4 - core index']
  #allocation1 [shape = 'u32[144,128]{1,0:T(1,128)}', space=vmem, size = 0x12000, scoped, tag = 'internal scratch']
  %s0 = inlined_call_operand.vmem [shape: f32[64,32], index: 0, kind: input, shape index: {}]
  %s1 = inlined_call_operand.vmem [shape: f32[64,32], index: 1, kind: input, shape index: {}]
  %s2 = inlined_call_operand.vmem [shape: f32[32,32], index: 2, kind: input, shape index: {}]
  %s3 = inlined_call_operand.vmem [shape: f32[1,32], index: 3, kind: input, shape index: {}]
  %s4 = inlined_call_operand.vmem [shape: f32[64,32], index: 4, kind: output, shape index: {}]
  %s5 = sld [smem:[#allocation0]]
  $region26: #{tgcn_forward.4} parent=0
    _
  %s7 = ssub.s32 1, %s5
  %s8 = scalar_select 0, %s7, %s5
  // Predicated region
  $region2: #{tgcn_forward.4} parent=0 // pred_check
    _
  $region3: #{tgcn_forward.4} parent=0 // pred_check_branch
    %10 = sbr.rel (0) target = $region5
  $region4: #{tgcn_forward.4} parent=0 // pred_region
    _
  $region5: #{tgcn_forward.4} parent=0 // pred_fallthru
    _
  // Predicated region
  $region6: #{tgcn_forward.4} parent=0 // pred_check
    _
  $region7: #{tgcn_forward.4} parent=0 // pred_check_branch
    %12 = sbr.rel (0) target = $region9
  $region8: #{tgcn_forward.4} parent=0 // pred_region
    _
  $region9: #{tgcn_forward.4} parent=0 // pred_fallthru
    _
  // Predicated region
  $region10: #{tgcn_forward.4} parent=0 // pred_check
    _
  $region11: #{tgcn_forward.4} parent=0 // pred_check_branch
    %14 = sbr.rel (0) target = $region13
  $region12: #{tgcn_forward.4} parent=0 // pred_region
    _
  $region13: #{tgcn_forward.4} parent=0 // pred_fallthru
    _
  // Predicated region
  $region14: #{tgcn_forward.4} parent=0 // pred_check
    _
  $region15: #{tgcn_forward.4} parent=0 // pred_check_branch
    %16 = sbr.rel (0) target = $region17
  $region16: #{tgcn_forward.4} parent=0 // pred_region
    _
  $region17: #{tgcn_forward.4} parent=0 // pred_fallthru
    _
  %v17 = vld [vmem:[%s0] sm:$0xff]
  %v18 = vld [vmem:[%s0 + $0x8] sm:$0xff]
  %v19 = vld [vmem:[%s0 + $0x10] sm:$0xff]
  %v20 = vld [vmem:[%s0 + $0x18] sm:$0xff]
  %v21 = vld [vmem:[%s0 + $0x20] sm:$0xff]
  %v22 = vld [vmem:[%s0 + $0x28] sm:$0xff]
  %v23 = vld [vmem:[%s0 + $0x30] sm:$0xff]
  %v24 = vld [vmem:[%s0 + $0x38] sm:$0xff]
  %v25 = vld [vmem:[%s1] sm:$0xff]
  %v26 = vld [vmem:[%s1 + $0x8] sm:$0xff]
  %v27 = vld [vmem:[%s1 + $0x10] sm:$0xff]
  %v28 = vld [vmem:[%s1 + $0x18] sm:$0xff]
  %v29 = vld [vmem:[%s1 + $0x20] sm:$0xff]
  %v30 = vld [vmem:[%s1 + $0x28] sm:$0xff]
  %v31 = vld [vmem:[%s1 + $0x30] sm:$0xff]
  %v32 = vld [vmem:[%s1 + $0x38] sm:$0xff]
  %v33 = vld [vmem:[%s2] sm:$0xff]
  %v34 = vld [vmem:[%s2 + $0x8] sm:$0xff]
  %v35 = vld [vmem:[%s2 + $0x10] sm:$0xff]
  %v36 = vld [vmem:[%s2 + $0x18] sm:$0xff]
  %vm37 = vcmask 261120
  %v39 = vsel %vm37, %v25, 0
  %v42 = vsel %vm37, %v26, 0
  %v45 = vsel %vm37, %v27, 0
  %v48 = vsel %vm37, %v28, 0
  %v51 = vsel %vm37, %v29, 0
  %v54 = vsel %vm37, %v30, 0
  %v57 = vsel %vm37, %v31, 0
  %v60 = vsel %vm37, %v32, 0
  %62 = vmatprep.subr.mxu0 0.0
  %63 = vmatpush1.msra.mxu0 0.0
  %64 = vmatprep.subr.mxu0 0.0
  %65 = vmatpush1.msra.mxu0 0.0
  %66 = vmatprep.subr.mxu0 0.0
  %67 = vmatpush1.msra.mxu0 0.0
  %68 = vmatprep.subr.mxu0 0.0
  %69 = vmatpush1.msra.mxu0 0.0
  %70 = vmatprep.subr.mxu0 0.0
  %71 = vmatpush1.msra.mxu0 0.0
  %72 = vmatprep.subr.mxu0 0.0
  %73 = vmatpush1.msra.mxu0 0.0
  %74 = vmatprep.subr.mxu0 0.0
  %75 = vmatpush1.msra.mxu0 0.0
  %76 = vmatprep.subr.mxu0 0.0
  %77 = vmatpush1.msra.mxu0 0.0
  %78 = vmatprep.subr.mxu0 0.0
  %79 = vmatpush1.msra.mxu0 0.0
  %80 = vmatprep.subr.mxu0 0.0
  %81 = vmatpush1.msra.mxu0 0.0
  %82 = vmatprep.subr.mxu0 0.0
  %83 = vmatpush1.msra.mxu0 0.0
  %84 = vmatprep.subr.mxu0 0.0
  %85 = vmatpush1.msra.mxu0 0.0
  %86 = vmatprep.subr.mxu0 0.0
  %87 = vmatpush1.msra.mxu0 %v36
  %88 = vmatprep.subr.mxu0 0.0
  %89 = vmatpush1.msra.mxu0 %v35
  %90 = vmatprep.subr.mxu0 0.0
  %91 = vmatpush1.msra.mxu0 %v34
  %92 = vmatprep.subr.mxu0 0.0
  %93 = vmatpush1.msra.mxu0 %v33
  %94 = vmatprep.subr.mxu0 0.0
  %95 = vmatpush2.msra.mxu0 0.0
  %96 = vmatprep.subr.mxu0 0.0
  %97 = vmatpush2.msra.mxu0 0.0
  %98 = vmatprep.subr.mxu0 0.0
  %99 = vmatpush2.msra.mxu0 0.0
  %100 = vmatprep.subr.mxu0 0.0
  %101 = vmatpush2.msra.mxu0 0.0
  %102 = vmatprep.subr.mxu0 0.0
  %103 = vmatpush2.msra.mxu0 0.0
  %104 = vmatprep.subr.mxu0 0.0
  %105 = vmatpush2.msra.mxu0 0.0
  %106 = vmatprep.subr.mxu0 0.0
  %107 = vmatpush2.msra.mxu0 0.0
  %108 = vmatprep.subr.mxu0 0.0
  %109 = vmatpush2.msra.mxu0 0.0
  %110 = vmatprep.subr.mxu0 0.0
  %111 = vmatpush2.msra.mxu0 0.0
  %112 = vmatprep.subr.mxu0 0.0
  %113 = vmatpush2.msra.mxu0 0.0
  %114 = vmatprep.subr.mxu0 0.0
  %115 = vmatpush2.msra.mxu0 0.0
  %116 = vmatprep.subr.mxu0 0.0
  %117 = vmatpush2.msra.mxu0 0.0
  %118 = vmatprep.subr.mxu0 0.0
  %119 = vmatpush2.msra.mxu0 0.0
  %120 = vmatprep.subr.mxu0 0.0
  %121 = vmatpush2.msra.mxu0 0.0
  %122 = vmatprep.subr.mxu0 0.0
  %123 = vmatpush2.msra.mxu0 0.0
  %124 = vmatprep.subr.mxu0 0.0
  %125 = vmatpush2.msra.mxu0 0.0
  %126 = vmatprep.mubr.f32.mxu0 0.0
  %127 = vmatmul.mubr.f32.gmra.mxu0 %v39
  %v128 = vpop.f32.mrf.mxu0
  %v129 = vadd.f32 0.0, %v128
  %v130 = vpop.f32.mrf.mxu0
  %131 = vmatprep.mubr.f32.mxu0 0.0
  %132 = vmatmul.mubr.f32.gmra.mxu0 %v42
  %v133 = vpop.f32.mrf.mxu0
  %v134 = vadd.f32 0.0, %v133
  %v135 = vpop.f32.mrf.mxu0
  %136 = vmatprep.mubr.f32.mxu0 0.0
  %137 = vmatmul.mubr.f32.gmra.mxu0 %v45
  %v138 = vpop.f32.mrf.mxu0
  %v139 = vadd.f32 0.0, %v138
  %v140 = vpop.f32.mrf.mxu0
  %141 = vmatprep.mubr.f32.mxu0 0.0
  %142 = vmatmul.mubr.f32.gmra.mxu0 %v48
  %v143 = vpop.f32.mrf.mxu0
  %v144 = vadd.f32 0.0, %v143
  %v145 = vpop.f32.mrf.mxu0
  %146 = vmatprep.mubr.f32.mxu0 0.0
  %147 = vmatmul.mubr.f32.gmra.mxu0 %v51
  %v148 = vpop.f32.mrf.mxu0
  %v149 = vadd.f32 0.0, %v148
  %v150 = vpop.f32.mrf.mxu0
  %151 = vmatprep.mubr.f32.mxu0 0.0
  %152 = vmatmul.mubr.f32.gmra.mxu0 %v54
  %v153 = vpop.f32.mrf.mxu0
  %v154 = vadd.f32 0.0, %v153
  %v155 = vpop.f32.mrf.mxu0
  %156 = vmatprep.mubr.f32.mxu0 0.0
  %157 = vmatmul.mubr.f32.gmra.mxu0 %v57
  %v158 = vpop.f32.mrf.mxu0
  %v159 = vadd.f32 0.0, %v158
  %v160 = vpop.f32.mrf.mxu0
  %161 = vmatprep.mubr.f32.mxu0 0.0
  %162 = vmatmul.mubr.f32.gmra.mxu0 %v60
  %v163 = vpop.f32.mrf.mxu0
  %v164 = vadd.f32 0.0, %v163
  %v165 = vpop.f32.mrf.mxu0
  %166 = vdwg.mxu0
  %v167 = vadd.f32 %v17, %v129
  %v168 = vadd.f32 %v18, %v134
  %v169 = vadd.f32 %v19, %v139
  %v170 = vadd.f32 %v20, %v144
  %v171 = vadd.f32 %v21, %v149
  %v172 = vadd.f32 %v22, %v154
  %v173 = vadd.f32 %v23, %v159
  %v174 = vadd.f32 %v24, %v164
  %v175 = vld [vmem:[%s3] sm:$0x1]
  %v177 = vlaneseq
  %v178 = vshrl.u32 %v177, 7
  %v179 = vsub.s32 0, %v178
  %v180 = vrot.slane %v175, %v179
  %v182 = vadd.f32 %v167, %v180
  %v183 = vadd.f32 %v168, %v180
  %v184 = vadd.f32 %v169, %v180
  %v185 = vadd.f32 %v170, %v180
  %v186 = vadd.f32 %v171, %v180
  %v187 = vadd.f32 %v172, %v180
  %v188 = vadd.f32 %v173, %v180
  %v189 = vadd.f32 %v174, %v180
  %v190 = vmax.f32 %v182, 0.0
  %v191 = vmax.f32 %v183, 0.0
  %v192 = vmax.f32 %v184, 0.0
  %v193 = vmax.f32 %v185, 0.0
  %v194 = vmax.f32 %v186, 0.0
  %v195 = vmax.f32 %v187, 0.0
  %v196 = vmax.f32 %v188, 0.0
  %v197 = vmax.f32 %v189, 0.0
  %198 = vst.msk [vmem:[%s4] sm:$0xff] %vm37, %v190
  %199 = vst.msk [vmem:[%s4 + $0x8] sm:$0xff] %vm37, %v191
  %200 = vst.msk [vmem:[%s4 + $0x10] sm:$0xff] %vm37, %v192
  %201 = vst.msk [vmem:[%s4 + $0x18] sm:$0xff] %vm37, %v193
  %202 = vst.msk [vmem:[%s4 + $0x20] sm:$0xff] %vm37, %v194
  %203 = vst.msk [vmem:[%s4 + $0x28] sm:$0xff] %vm37, %v195
  %204 = vst.msk [vmem:[%s4 + $0x30] sm:$0xff] %vm37, %v196
  %205 = vst.msk [vmem:[%s4 + $0x38] sm:$0xff] %vm37, %v197
  // Predicated region
  $region18: #{tgcn_forward.4} parent=0 // pred_check
    _
  $region19: #{tgcn_forward.4} parent=0 // pred_check_branch
    %207 = sbr.rel (0) target = $region21
  $region20: #{tgcn_forward.4} parent=0 // pred_region
    _
  $region21: #{tgcn_forward.4} parent=0 // pred_fallthru
    _
  // Predicated region
  $region22: #{tgcn_forward.4} parent=0 // pred_check
    _
  $region23: #{tgcn_forward.4} parent=0 // pred_check_branch
    %209 = sbr.rel (0) target = $region25
  $region24: #{tgcn_forward.4} parent=0 // pred_region
    _
  $region25: #{tgcn_forward.4} parent=0 // pred_fallthru
    _

// kernel: tgcn_forward.5
$region0: #{tgcn_forward.5}
  #allocation0 [shape = 'u32[]', space=smem, size = 0x4, offset = 0x4, fixed_abs, tag = 'smem constant byte address 0x4 - core index']
  #allocation1 [shape = 'u32[144,128]{1,0:T(1,128)}', space=vmem, size = 0x12000, scoped, tag = 'internal scratch']
  #allocation2 [shape = 'f32[1,1]{1,0:T(1,128)S(1)}', space=vmem, size = 0x200, scoped, tag = 'scoped memory for tgcn_forward.5']
  %s0 = inlined_call_operand.vmem [shape: f32[8,64], index: 0, kind: input, shape index: {}]
  %s1 = inlined_call_operand.vmem [shape: f32[64,64], index: 1, kind: input, shape index: {}]
  %s2 = inlined_call_operand.vmem [shape: f32[1,64], index: 2, kind: input, shape index: {}]
  %s3 = inlined_call_operand.vmem [shape: f32[64,32], index: 3, kind: input, shape index: {}]
  %s4 = inlined_call_operand.vmem [shape: f32[1,32], index: 4, kind: input, shape index: {}]
  %s5 = inlined_call_operand.vmem [shape: f32[32,16], index: 5, kind: input, shape index: {}]
  %s6 = inlined_call_operand.vmem [shape: f32[1,16], index: 6, kind: input, shape index: {}]
  %s7 = inlined_call_operand.vmem [shape: f32[16,1], index: 7, kind: input, shape index: {}]
  %s8 = inlined_call_operand.<no memory space> [shape: f32[1,1], index: 8, kind: input, shape index: {}]
  %s9 = inlined_call_operand.vmem [shape: f32[8,1], index: 9, kind: output, shape index: {}]
  %s10 = sld [smem:[#allocation0]]
  $region46: #{tgcn_forward.5} parent=0
    _
  %s12 = ssub.s32 1, %s10
  %s13 = scalar_select 0, %s12, %s10
  %v14 = vstv %s8
  %15 = vst [vmem:[#allocation2] sm:$0x1] %v14
  // Predicated region
  $region2: #{tgcn_forward.5} parent=0 // pred_check
    _
  $region3: #{tgcn_forward.5} parent=0 // pred_check_branch
    %17 = sbr.rel (0) target = $region5
  $region4: #{tgcn_forward.5} parent=0 // pred_region
    _
  $region5: #{tgcn_forward.5} parent=0 // pred_fallthru
    _
  // Predicated region
  $region6: #{tgcn_forward.5} parent=0 // pred_check
    _
  $region7: #{tgcn_forward.5} parent=0 // pred_check_branch
    %19 = sbr.rel (0) target = $region9
  $region8: #{tgcn_forward.5} parent=0 // pred_region
    _
  $region9: #{tgcn_forward.5} parent=0 // pred_fallthru
    _
  // Predicated region
  $region10: #{tgcn_forward.5} parent=0 // pred_check
    _
  $region11: #{tgcn_forward.5} parent=0 // pred_check_branch
    %21 = sbr.rel (0) target = $region13
  $region12: #{tgcn_forward.5} parent=0 // pred_region
    _
  $region13: #{tgcn_forward.5} parent=0 // pred_fallthru
    _
  // Predicated region
  $region14: #{tgcn_forward.5} parent=0 // pred_check
    _
  $region15: #{tgcn_forward.5} parent=0 // pred_check_branch
    %23 = sbr.rel (0) target = $region17
  $region16: #{tgcn_forward.5} parent=0 // pred_region
    _
  $region17: #{tgcn_forward.5} parent=0 // pred_fallthru
    _
  // Predicated region
  $region18: #{tgcn_forward.5} parent=0 // pred_check
    _
  $region19: #{tgcn_forward.5} parent=0 // pred_check_branch
    %25 = sbr.rel (0) target = $region21
  $region20: #{tgcn_forward.5} parent=0 // pred_region
    _
  $region21: #{tgcn_forward.5} parent=0 // pred_fallthru
    _
  // Predicated region
  $region22: #{tgcn_forward.5} parent=0 // pred_check
    _
  $region23: #{tgcn_forward.5} parent=0 // pred_check_branch
    %27 = sbr.rel (0) target = $region25
  $region24: #{tgcn_forward.5} parent=0 // pred_region
    _
  $region25: #{tgcn_forward.5} parent=0 // pred_fallthru
    _
  // Predicated region
  $region26: #{tgcn_forward.5} parent=0 // pred_check
    _
  $region27: #{tgcn_forward.5} parent=0 // pred_check_branch
    %29 = sbr.rel (0) target = $region29
  $region28: #{tgcn_forward.5} parent=0 // pred_region
    _
  $region29: #{tgcn_forward.5} parent=0 // pred_fallthru
    _
  // Predicated region
  $region30: #{tgcn_forward.5} parent=0 // pred_check
    _
  $region31: #{tgcn_forward.5} parent=0 // pred_check_branch
    %31 = sbr.rel (0) target = $region33
  $region32: #{tgcn_forward.5} parent=0 // pred_region
    _
  $region33: #{tgcn_forward.5} parent=0 // pred_fallthru
    _
  // Predicated region
  $region34: #{tgcn_forward.5} parent=0 // pred_check
    _
  $region35: #{tgcn_forward.5} parent=0 // pred_check_branch
    %33 = sbr.rel (0) target = $region37
  $region36: #{tgcn_forward.5} parent=0 // pred_region
    _
  $region37: #{tgcn_forward.5} parent=0 // pred_fallthru
    _
  %v34 = vld [vmem:[%s0] sm:$0xff]
  %v35 = vld [vmem:[%s1] sm:$0xff]
  %v36 = vld [vmem:[%s1 + $0x8] sm:$0xff]
  %v37 = vld [vmem:[%s1 + $0x10] sm:$0xff]
  %v38 = vld [vmem:[%s1 + $0x18] sm:$0xff]
  %v39 = vld [vmem:[%s1 + $0x20] sm:$0xff]
  %v40 = vld [vmem:[%s1 + $0x28] sm:$0xff]
  %v41 = vld [vmem:[%s1 + $0x30] sm:$0xff]
  %v42 = vld [vmem:[%s1 + $0x38] sm:$0xff]
  %v43 = vld [vmem:[%s2] sm:$0x1]
  %v45 = vlaneseq
  %v46 = vshrl.u32 %v45, 7
  %v47 = vsub.s32 0, %v46
  %v48 = vrot.slane %v43, %v47
  %vm50 = vcmask 523264
  %v52 = vsel %vm50, %v34, 0
  %54 = vmatprep.subr.mxu0 0.0
  %55 = vmatpush1.msra.mxu0 0.0
  %56 = vmatprep.subr.mxu0 0.0
  %57 = vmatpush1.msra.mxu0 0.0
  %58 = vmatprep.subr.mxu0 0.0
  %59 = vmatpush1.msra.mxu0 0.0
  %60 = vmatprep.subr.mxu0 0.0
  %61 = vmatpush1.msra.mxu0 0.0
  %62 = vmatprep.subr.mxu0 0.0
  %63 = vmatpush1.msra.mxu0 0.0
  %64 = vmatprep.subr.mxu0 0.0
  %65 = vmatpush1.msra.mxu0 0.0
  %66 = vmatprep.subr.mxu0 0.0
  %67 = vmatpush1.msra.mxu0 0.0
  %68 = vmatprep.subr.mxu0 0.0
  %69 = vmatpush1.msra.mxu0 0.0
  %70 = vmatprep.subr.mxu0 0.0
  %71 = vmatpush1.msra.mxu0 %v42
  %72 = vmatprep.subr.mxu0 0.0
  %73 = vmatpush1.msra.mxu0 %v41
  %74 = vmatprep.subr.mxu0 0.0
  %75 = vmatpush1.msra.mxu0 %v40
  %76 = vmatprep.subr.mxu0 0.0
  %77 = vmatpush1.msra.mxu0 %v39
  %78 = vmatprep.subr.mxu0 0.0
  %79 = vmatpush1.msra.mxu0 %v38
  %80 = vmatprep.subr.mxu0 0.0
  %81 = vmatpush1.msra.mxu0 %v37
  %82 = vmatprep.subr.mxu0 0.0
  %83 = vmatpush1.msra.mxu0 %v36
  %84 = vmatprep.subr.mxu0 0.0
  %85 = vmatpush1.msra.mxu0 %v35
  %86 = vmatprep.subr.mxu0 0.0
  %87 = vmatpush2.msra.mxu0 0.0
  %88 = vmatprep.subr.mxu0 0.0
  %89 = vmatpush2.msra.mxu0 0.0
  %90 = vmatprep.subr.mxu0 0.0
  %91 = vmatpush2.msra.mxu0 0.0
  %92 = vmatprep.subr.mxu0 0.0
  %93 = vmatpush2.msra.mxu0 0.0
  %94 = vmatprep.subr.mxu0 0.0
  %95 = vmatpush2.msra.mxu0 0.0
  %96 = vmatprep.subr.mxu0 0.0
  %97 = vmatpush2.msra.mxu0 0.0
  %98 = vmatprep.subr.mxu0 0.0
  %99 = vmatpush2.msra.mxu0 0.0
  %100 = vmatprep.subr.mxu0 0.0
  %101 = vmatpush2.msra.mxu0 0.0
  %102 = vmatprep.subr.mxu0 0.0
  %103 = vmatpush2.msra.mxu0 0.0
  %104 = vmatprep.subr.mxu0 0.0
  %105 = vmatpush2.msra.mxu0 0.0
  %106 = vmatprep.subr.mxu0 0.0
  %107 = vmatpush2.msra.mxu0 0.0
  %108 = vmatprep.subr.mxu0 0.0
  %109 = vmatpush2.msra.mxu0 0.0
  %110 = vmatprep.subr.mxu0 0.0
  %111 = vmatpush2.msra.mxu0 0.0
  %112 = vmatprep.subr.mxu0 0.0
  %113 = vmatpush2.msra.mxu0 0.0
  %114 = vmatprep.subr.mxu0 0.0
  %115 = vmatpush2.msra.mxu0 0.0
  %116 = vmatprep.subr.mxu0 0.0
  %117 = vmatpush2.msra.mxu0 0.0
  %118 = vmatprep.mubr.f32.mxu0 0.0
  %119 = vmatmul.mubr.f32.gmra.mxu0 %v52
  %v120 = vpop.f32.mrf.mxu0
  %v121 = vadd.f32 %v48, %v120
  %v122 = vpop.f32.mrf.mxu0
  %123 = vdwg.mxu0
  %v124 = vmax.f32 %v121, 0.0
  %v125 = vld [vmem:[%s3] sm:$0xff]
  %v126 = vld [vmem:[%s3 + $0x8] sm:$0xff]
  %v127 = vld [vmem:[%s3 + $0x10] sm:$0xff]
  %v128 = vld [vmem:[%s3 + $0x18] sm:$0xff]
  %v129 = vld [vmem:[%s3 + $0x20] sm:$0xff]
  %v130 = vld [vmem:[%s3 + $0x28] sm:$0xff]
  %v131 = vld [vmem:[%s3 + $0x30] sm:$0xff]
  %v132 = vld [vmem:[%s3 + $0x38] sm:$0xff]
  %v133 = vld [vmem:[%s4] sm:$0x1]
  %v135 = vlaneseq
  %v136 = vshrl.u32 %v135, 7
  %v137 = vsub.s32 0, %v136
  %v138 = vrot.slane %v133, %v137
  %v141 = vsel %vm50, %v124, 0
  %143 = vmatprep.subr.mxu0 0.0
  %144 = vmatpush1.msra.mxu0 0.0
  %145 = vmatprep.subr.mxu0 0.0
  %146 = vmatpush1.msra.mxu0 0.0
  %147 = vmatprep.subr.mxu0 0.0
  %148 = vmatpush1.msra.mxu0 0.0
  %149 = vmatprep.subr.mxu0 0.0
  %150 = vmatpush1.msra.mxu0 0.0
  %151 = vmatprep.subr.mxu0 0.0
  %152 = vmatpush1.msra.mxu0 0.0
  %153 = vmatprep.subr.mxu0 0.0
  %154 = vmatpush1.msra.mxu0 0.0
  %155 = vmatprep.subr.mxu0 0.0
  %156 = vmatpush1.msra.mxu0 0.0
  %157 = vmatprep.subr.mxu0 0.0
  %158 = vmatpush1.msra.mxu0 0.0
  %159 = vmatprep.subr.mxu0 0.0
  %160 = vmatpush1.msra.mxu0 %v132
  %161 = vmatprep.subr.mxu0 0.0
  %162 = vmatpush1.msra.mxu0 %v131
  %163 = vmatprep.subr.mxu0 0.0
  %164 = vmatpush1.msra.mxu0 %v130
  %165 = vmatprep.subr.mxu0 0.0
  %166 = vmatpush1.msra.mxu0 %v129
  %167 = vmatprep.subr.mxu0 0.0
  %168 = vmatpush1.msra.mxu0 %v128
  %169 = vmatprep.subr.mxu0 0.0
  %170 = vmatpush1.msra.mxu0 %v127
  %171 = vmatprep.subr.mxu0 0.0
  %172 = vmatpush1.msra.mxu0 %v126
  %173 = vmatprep.subr.mxu0 0.0
  %174 = vmatpush1.msra.mxu0 %v125
  %175 = vmatprep.subr.mxu0 0.0
  %176 = vmatpush2.msra.mxu0 0.0
  %177 = vmatprep.subr.mxu0 0.0
  %178 = vmatpush2.msra.mxu0 0.0
  %179 = vmatprep.subr.mxu0 0.0
  %180 = vmatpush2.msra.mxu0 0.0
  %181 = vmatprep.subr.mxu0 0.0
  %182 = vmatpush2.msra.mxu0 0.0
  %183 = vmatprep.subr.mxu0 0.0
  %184 = vmatpush2.msra.mxu0 0.0
  %185 = vmatprep.subr.mxu0 0.0
  %186 = vmatpush2.msra.mxu0 0.0
  %187 = vmatprep.subr.mxu0 0.0
  %188 = vmatpush2.msra.mxu0 0.0
  %189 = vmatprep.subr.mxu0 0.0
  %190 = vmatpush2.msra.mxu0 0.0
  %191 = vmatprep.subr.mxu0 0.0
  %192 = vmatpush2.msra.mxu0 0.0
  %193 = vmatprep.subr.mxu0 0.0
  %194 = vmatpush2.msra.mxu0 0.0
  %195 = vmatprep.subr.mxu0 0.0
  %196 = vmatpush2.msra.mxu0 0.0
  %197 = vmatprep.subr.mxu0 0.0
  %198 = vmatpush2.msra.mxu0 0.0
  %199 = vmatprep.subr.mxu0 0.0
  %200 = vmatpush2.msra.mxu0 0.0
  %201 = vmatprep.subr.mxu0 0.0
  %202 = vmatpush2.msra.mxu0 0.0
  %203 = vmatprep.subr.mxu0 0.0
  %204 = vmatpush2.msra.mxu0 0.0
  %205 = vmatprep.subr.mxu0 0.0
  %206 = vmatpush2.msra.mxu0 0.0
  %207 = vmatprep.mubr.f32.mxu0 0.0
  %208 = vmatmul.mubr.f32.gmra.mxu0 %v141
  %v209 = vpop.f32.mrf.mxu0
  %v210 = vadd.f32 %v138, %v209
  %v211 = vpop.f32.mrf.mxu0
  %212 = vdwg.mxu0
  %v213 = vmax.f32 %v210, 0.0
  %v214 = vld [vmem:[%s5] sm:$0xff]
  %v215 = vld [vmem:[%s5 + $0x8] sm:$0xff]
  %v216 = vld [vmem:[%s5 + $0x10] sm:$0xff]
  %v217 = vld [vmem:[%s5 + $0x18] sm:$0xff]
  %v218 = vld [vmem:[%s6] sm:$0x1]
  %v220 = vlaneseq
  %v221 = vshrl.u32 %v220, 7
  %v222 = vsub.s32 0, %v221
  %v223 = vrot.slane %v218, %v222
  %vm225 = vcmask 261120
  %v227 = vsel %vm225, %v213, 0
  %229 = vmatprep.subr.mxu0 0.0
  %230 = vmatpush1.msra.mxu0 0.0
  %231 = vmatprep.subr.mxu0 0.0
  %232 = vmatpush1.msra.mxu0 0.0
  %233 = vmatprep.subr.mxu0 0.0
  %234 = vmatpush1.msra.mxu0 0.0
  %235 = vmatprep.subr.mxu0 0.0
  %236 = vmatpush1.msra.mxu0 0.0
  %237 = vmatprep.subr.mxu0 0.0
  %238 = vmatpush1.msra.mxu0 0.0
  %239 = vmatprep.subr.mxu0 0.0
  %240 = vmatpush1.msra.mxu0 0.0
  %241 = vmatprep.subr.mxu0 0.0
  %242 = vmatpush1.msra.mxu0 0.0
  %243 = vmatprep.subr.mxu0 0.0
  %244 = vmatpush1.msra.mxu0 0.0
  %245 = vmatprep.subr.mxu0 0.0
  %246 = vmatpush1.msra.mxu0 0.0
  %247 = vmatprep.subr.mxu0 0.0
  %248 = vmatpush1.msra.mxu0 0.0
  %249 = vmatprep.subr.mxu0 0.0
  %250 = vmatpush1.msra.mxu0 0.0
  %251 = vmatprep.subr.mxu0 0.0
  %252 = vmatpush1.msra.mxu0 0.0
  %253 = vmatprep.subr.mxu0 0.0
  %254 = vmatpush1.msra.mxu0 %v217
  %255 = vmatprep.subr.mxu0 0.0
  %256 = vmatpush1.msra.mxu0 %v216
  %257 = vmatprep.subr.mxu0 0.0
  %258 = vmatpush1.msra.mxu0 %v215
  %259 = vmatprep.subr.mxu0 0.0
  %260 = vmatpush1.msra.mxu0 %v214
  %261 = vmatprep.subr.mxu0 0.0
  %262 = vmatpush2.msra.mxu0 0.0
  %263 = vmatprep.subr.mxu0 0.0
  %264 = vmatpush2.msra.mxu0 0.0
  %265 = vmatprep.subr.mxu0 0.0
  %266 = vmatpush2.msra.mxu0 0.0
  %267 = vmatprep.subr.mxu0 0.0
  %268 = vmatpush2.msra.mxu0 0.0
  %269 = vmatprep.subr.mxu0 0.0
  %270 = vmatpush2.msra.mxu0 0.0
  %271 = vmatprep.subr.mxu0 0.0
  %272 = vmatpush2.msra.mxu0 0.0
  %273 = vmatprep.subr.mxu0 0.0
  %274 = vmatpush2.msra.mxu0 0.0
  %275 = vmatprep.subr.mxu0 0.0
  %276 = vmatpush2.msra.mxu0 0.0
  %277 = vmatprep.subr.mxu0 0.0
  %278 = vmatpush2.msra.mxu0 0.0
  %279 = vmatprep.subr.mxu0 0.0
  %280 = vmatpush2.msra.mxu0 0.0
  %281 = vmatprep.subr.mxu0 0.0
  %282 = vmatpush2.msra.mxu0 0.0
  %283 = vmatprep.subr.mxu0 0.0
  %284 = vmatpush2.msra.mxu0 0.0
  %285 = vmatprep.subr.mxu0 0.0
  %286 = vmatpush2.msra.mxu0 0.0
  %287 = vmatprep.subr.mxu0 0.0
  %288 = vmatpush2.msra.mxu0 0.0
  %289 = vmatprep.subr.mxu0 0.0
  %290 = vmatpush2.msra.mxu0 0.0
  %291 = vmatprep.subr.mxu0 0.0
  %292 = vmatpush2.msra.mxu0 0.0
  %293 = vmatprep.mubr.f32.mxu0 0.0
  %294 = vmatmul.mubr.f32.gmra.mxu0 %v227
  %v295 = vpop.f32.mrf.mxu0
  %v296 = vadd.f32 %v223, %v295
  %v297 = vpop.f32.mrf.mxu0
  %298 = vdwg.mxu0
  %v299 = vmax.f32 %v296, 0.0
  %v300 = vld [vmem:[%s7] sm:$0xff]
  %v301 = vld [vmem:[%s7 + $0x8] sm:$0xff]
  %v302 = vld [vmem:[#allocation2] sm:$0x1]
  %v304 = vlaneseq
  %v305 = vshrl.u32 %v304, 7
  %v306 = vsub.s32 0, %v305
  %v307 = vrot.slane %v302, %v306
  %vm309 = vcmask 130048
  %v311 = vsel %vm309, %v299, 0
  %313 = vmatprep.subr.mxu0 0.0
  %314 = vmatpush1.msra.mxu0 0.0
  %315 = vmatprep.subr.mxu0 0.0
  %316 = vmatpush1.msra.mxu0 0.0
  %317 = vmatprep.subr.mxu0 0.0
  %318 = vmatpush1.msra.mxu0 0.0
  %319 = vmatprep.subr.mxu0 0.0
  %320 = vmatpush1.msra.mxu0 0.0
  %321 = vmatprep.subr.mxu0 0.0
  %322 = vmatpush1.msra.mxu0 0.0
  %323 = vmatprep.subr.mxu0 0.0
  %324 = vmatpush1.msra.mxu0 0.0
  %325 = vmatprep.subr.mxu0 0.0
  %326 = vmatpush1.msra.mxu0 0.0
  %327 = vmatprep.subr.mxu0 0.0
  %328 = vmatpush1.msra.mxu0 0.0
  %329 = vmatprep.subr.mxu0 0.0
  %330 = vmatpush1.msra.mxu0 0.0
  %331 = vmatprep.subr.mxu0 0.0
  %332 = vmatpush1.msra.mxu0 0.0
  %333 = vmatprep.subr.mxu0 0.0
  %334 = vmatpush1.msra.mxu0 0.0
  %335 = vmatprep.subr.mxu0 0.0
  %336 = vmatpush1.msra.mxu0 0.0
  %337 = vmatprep.subr.mxu0 0.0
  %338 = vmatpush1.msra.mxu0 0.0
  %339 = vmatprep.subr.mxu0 0.0
  %340 = vmatpush1.msra.mxu0 0.0
  %341 = vmatprep.subr.mxu0 0.0
  %342 = vmatpush1.msra.mxu0 %v301
  %343 = vmatprep.subr.mxu0 0.0
  %344 = vmatpush1.msra.mxu0 %v300
  %345 = vmatprep.subr.mxu0 0.0
  %346 = vmatpush2.msra.mxu0 0.0
  %347 = vmatprep.subr.mxu0 0.0
  %348 = vmatpush2.msra.mxu0 0.0
  %349 = vmatprep.subr.mxu0 0.0
  %350 = vmatpush2.msra.mxu0 0.0
  %351 = vmatprep.subr.mxu0 0.0
  %352 = vmatpush2.msra.mxu0 0.0
  %353 = vmatprep.subr.mxu0 0.0
  %354 = vmatpush2.msra.mxu0 0.0
  %355 = vmatprep.subr.mxu0 0.0
  %356 = vmatpush2.msra.mxu0 0.0
  %357 = vmatprep.subr.mxu0 0.0
  %358 = vmatpush2.msra.mxu0 0.0
  %359 = vmatprep.subr.mxu0 0.0
  %360 = vmatpush2.msra.mxu0 0.0
  %361 = vmatprep.subr.mxu0 0.0
  %362 = vmatpush2.msra.mxu0 0.0
  %363 = vmatprep.subr.mxu0 0.0
  %364 = vmatpush2.msra.mxu0 0.0
  %365 = vmatprep.subr.mxu0 0.0
  %366 = vmatpush2.msra.mxu0 0.0
  %367 = vmatprep.subr.mxu0 0.0
  %368 = vmatpush2.msra.mxu0 0.0
  %369 = vmatprep.subr.mxu0 0.0
  %370 = vmatpush2.msra.mxu0 0.0
  %371 = vmatprep.subr.mxu0 0.0
  %372 = vmatpush2.msra.mxu0 0.0
  %373 = vmatprep.subr.mxu0 0.0
  %374 = vmatpush2.msra.mxu0 0.0
  %375 = vmatprep.subr.mxu0 0.0
  %376 = vmatpush2.msra.mxu0 0.0
  %377 = vmatprep.mubr.f32.mxu0 0.0
  %378 = vmatmul.mubr.f32.gmra.mxu0 %v311
  %v379 = vpop.f32.mrf.mxu0
  %v380 = vadd.f32 %v307, %v379
  %v381 = vpop.f32.mrf.mxu0
  %382 = vdwg.mxu0
  %vm383 = vcmask 7168
  %384 = vst.msk [vmem:[%s9] sm:$0xff] %vm383, %v380
  // Predicated region
  $region38: #{tgcn_forward.5} parent=0 // pred_check
    _
  $region39: #{tgcn_forward.5} parent=0 // pred_check_branch
    %386 = sbr.rel (0) target = $region41
  $region40: #{tgcn_forward.5} parent=0 // pred_region
    _
  $region41: #{tgcn_forward.5} parent=0 // pred_fallthru
    _
  // Predicated region
  $region42: #{tgcn_forward.5} parent=0 // pred_check
    _
  $region43: #{tgcn_forward.5} parent=0 // pred_check_branch
    %388 = sbr.rel (0) target = $region45
  $region44: #{tgcn_forward.5} parent=0 // pred_region
    _
  $region45: #{tgcn_forward.5} parent=0 // pred_fallthru
    _

</llo_original>
